<compile_context>
chip_gen: v7x
topology: tpu7x:2x2x1
jax: 0.10.0
libtpu: 0.0.40
codegen_flags: <defaults>
</compile_context>

<pallas_src>
import jax
import jax.numpy as jnp
from jax.experimental import pallas as pl
from jax.experimental.pallas import tpu as pltpu


def _round_up(n, m):
    return ((n + m - 1) // m) * m


# ---------------------------------------------------------------------------
# Kernels
# ---------------------------------------------------------------------------
def dual_cmam_kernel_fused(
    x_ref,                      # (TB, d_in) f32
    w_enc_ref, b_enc_ref,       # (d_in, Sp) bf16, (1, Sp) f32
    w_d1_ref, b_d1_ref,         # (Sp, Hp)   bf16, (1, Hp) f32   (both branches' layer 1, concat)
    w_d2_ref, b_d2_ref,         # (Hp, Ep)   bf16, (1, Ep) f32   (block-diagonal layer 2)
    out_ref,                    # (TB, Ep)   lane-dense: [rec_one | rec_two | pad]
):
    # --- input encoder: Linear + ReLU (bf16 matmul, f32 accumulate/epilogue) ---
    x = x_ref[...].astype(jnp.bfloat16)
    h = jnp.dot(x, w_enc_ref[...], preferred_element_type=jnp.float32) + b_enc_ref[...]
    h = jnp.maximum(h, 0.0).astype(jnp.bfloat16)

    # --- both decoders' first Linear + ReLU in one matmul (Dropout = id at eval) ---
    h12 = jnp.dot(h, w_d1_ref[...], preferred_element_type=jnp.float32) + b_d1_ref[...]
    h12 = jnp.maximum(h12, 0.0).astype(jnp.bfloat16)

    # --- both decoders' second Linear via block-diagonal fused weight ---
    out_ref[...] = (
        jnp.dot(h12, w_d2_ref[...], preferred_element_type=jnp.float32) + b_d2_ref[...]
    ).astype(out_ref.dtype)


def dual_cmam_kernel_split(
    x_ref,                      # (TB, d_in) f32
    w_enc_ref, b_enc_ref,       # (d_in, Sp) bf16, (1, Sp) f32
    w_d1_ref, b_d1_ref,         # (Sp, Hp1+Hp2) bf16, (1, Hp1+Hp2) f32
    w_d2a_ref, w_d2b_ref,       # (Hp1, E1p) bf16, (Hp2, E2p) bf16
    b_d2_ref,                   # (1, E1p+E2p) f32
    out_ref,                    # (TB, E1p+E2p) lane-dense
):
    hp1 = w_d2a_ref.shape[0]
    e1p = w_d2a_ref.shape[1]

    x = x_ref[...].astype(jnp.bfloat16)
    h = jnp.dot(x, w_enc_ref[...], preferred_element_type=jnp.float32) + b_enc_ref[...]
    h = jnp.maximum(h, 0.0).astype(jnp.bfloat16)

    h12 = jnp.dot(h, w_d1_ref[...], preferred_element_type=jnp.float32) + b_d1_ref[...]
    h12 = jnp.maximum(h12, 0.0).astype(jnp.bfloat16)

    # Two lane-aligned second-layer matmuls (no zero-block FLOPs for large H).
    out_ref[:, :e1p] = (
        jnp.dot(h12[:, :hp1], w_d2a_ref[...], preferred_element_type=jnp.float32)
        + b_d2_ref[:, :e1p]
    ).astype(out_ref.dtype)
    out_ref[:, e1p:] = (
        jnp.dot(h12[:, hp1:], w_d2b_ref[...], preferred_element_type=jnp.float32)
        + b_d2_ref[:, e1p:]
    ).astype(out_ref.dtype)


# ---------------------------------------------------------------------------
# Parameter packing
# ---------------------------------------------------------------------------
def pack_params(p, dtype=jnp.bfloat16):
    """Fuse the two decoder branches and lane-pad the *output* feature dims.

    The encoder input axis is left at its natural width (no padded copy of x).
    Layer-2 fusion is block-diagonal only for small H (< 128); otherwise the
    two branches keep separate, individually lane-padded layer-2 weights.
    """
    d_in, S = p["w_enc"].shape
    _, H = p["w1a"].shape
    _, E1 = p["w1b"].shape
    _, E2 = p["w2b"].shape

    Sp = _round_up(S, 128)
    fuse_l2 = H < 128  # tiny hidden: block-diag fusion cheaper than per-branch padding

    def pad2(a, shape):
        return jnp.zeros(shape, jnp.float32).at[: a.shape[0], : a.shape[1]].set(a)

    w_enc = pad2(p["w_enc"], (d_in, Sp)).astype(dtype)
    b_enc = pad2(p["b_enc"], (1, Sp))

    if fuse_l2:
        Hp = _round_up(2 * H, 128)
        Ep = _round_up(E1 + E2, 128)
        w_d1 = (
            jnp.zeros((Sp, Hp), jnp.float32)
            .at[:S, :H].set(p["w1a"])
            .at[:S, H:2 * H].set(p["w2a"])
            .astype(dtype)
        )
        b_d1 = (
            jnp.zeros((1, Hp), jnp.float32)
            .at[:, :H].set(p["b1a"])
            .at[:, H:2 * H].set(p["b2a"])
        )
        w_d2 = (
            jnp.zeros((Hp, Ep), jnp.float32)
            .at[:H, :E1].set(p["w1b"])
            .at[H:2 * H, E1:E1 + E2].set(p["w2b"])
            .astype(dtype)
        )
        b_d2 = (
            jnp.zeros((1, Ep), jnp.float32)
            .at[:, :E1].set(p["b1b"])
            .at[:, E1:E1 + E2].set(p["b2b"])
        )
        weights = (w_enc, b_enc, w_d1, b_d1, w_d2, b_d2)
        dims = dict(mode="fused", d_in=d_in, S=S, H=H, E1=E1, E2=E2,
                    Sp=Sp, Hp=Hp, Ep=Ep, E1_off=0, E2_off=E1)
    else:
        Hp1 = _round_up(H, 128)
        Hp2 = _round_up(H, 128)
        Hp = Hp1 + Hp2
        E1p = _round_up(E1, 128)
        E2p = _round_up(E2, 128)
        Ep = E1p + E2p
        w_d1 = (
            jnp.zeros((Sp, Hp), jnp.float32)
            .at[:S, :H].set(p["w1a"])
            .at[:S, Hp1:Hp1 + H].set(p["w2a"])
            .astype(dtype)
        )
        b_d1 = (
            jnp.zeros((1, Hp), jnp.float32)
            .at[:, :H].set(p["b1a"])
            .at[:, Hp1:Hp1 + H].set(p["b2a"])
        )
        w_d2a = pad2(p["w1b"], (Hp1, E1p)).astype(dtype)
        w_d2b = pad2(p["w2b"], (Hp2, E2p)).astype(dtype)
        b_d2 = (
            jnp.zeros((1, Ep), jnp.float32)
            .at[:, :E1].set(p["b1b"])
            .at[:, E1p:E1p + E2].set(p["b2b"])
        )
        weights = (w_enc, b_enc, w_d1, b_d1, w_d2a, w_d2b, b_d2)
        dims = dict(mode="split", d_in=d_in, S=S, H=H, E1=E1, E2=E2,
                    Sp=Sp, Hp=Hp, Ep=Ep, E1_off=0, E2_off=E1p)

    return dict(weights=weights, dims=dims)


# ---------------------------------------------------------------------------
# Wrapper
# ---------------------------------------------------------------------------
def dual_cmam_forward(x, packed, *, block_rows=1024, out_dtype=jnp.float32):
    """x: (B, d_in) float32; packed: output of pack_params. Returns (rec_one, rec_two)."""
    d = packed["dims"]
    weights = packed["weights"]
    B, d_in = x.shape
    assert d_in == d["d_in"]
    Sp, Hp, Ep = d["Sp"], d["Hp"], d["Ep"]
    E1, E2 = d["E1"], d["E2"]

    # Batch tile: large (amortize per-step pipeline overhead), multiple of 8,
    # and capped at ~half the batch so the "parallel" axis has >= 2 grid steps
    # for v7x's two TensorCores whenever the batch allows it.
    TB = _round_up(min(block_rows, max(B, 8)), 8)
    if B > 8:
        TB = min(TB, _round_up((B + 1) // 2, 8))
    B_pad = _round_up(B, TB)

    x = x.astype(jnp.float32)
    if B_pad != B:
        # Pad only the batch dim; the feature dim keeps its natural width, so
        # no lane-padded copy of x is ever written to / read from HBM.
        x = jnp.zeros((B_pad, d_in), jnp.float32).at[:B].set(x)

    # Weights: full-array blocks with constant index_map (resident across grid
    # steps) and single-buffered -- no point double-buffering a block that is
    # fetched exactly once.
    w_specs = [
        pl.BlockSpec(w.shape, lambda i: (0, 0), pipeline_mode=pl.Buffered(1))
        for w in weights
    ]

    # Explicit VMEM budget (default scoped limits: 16 MiB v5e / 32 MiB v6e,v7x).
    out_itemsize = jnp.dtype(out_dtype).itemsize
    w_bytes = sum(int(w.size) * w.dtype.itemsize for w in weights)
    vmem_bytes = (
        2 * TB * d_in * 4              # double-buffered input tile
        + 2 * TB * Ep * out_itemsize   # double-buffered output tile
        + w_bytes                      # single-buffered resident weights
        + TB * (Sp + Hp) * 8           # f32 + bf16 intermediates (rough)
    )
    vmem_limit = int(min(max(2 * vmem_bytes, 16 * 1024 * 1024), 48 * 1024 * 1024))

    kernel = dual_cmam_kernel_fused if d["mode"] == "fused" else dual_cmam_kernel_split

    out = pl.pallas_call(
        kernel,
        out_shape=jax.ShapeDtypeStruct((B_pad, Ep), out_dtype),
        grid=(B_pad // TB,),
        in_specs=[pl.BlockSpec((TB, d_in), lambda i: (i, 0))] + w_specs,
        out_specs=pl.BlockSpec((TB, Ep), lambda i: (i, 0)),
        compiler_params=pltpu.CompilerParams(
            dimension_semantics=("parallel",),
            vmem_limit_bytes=vmem_limit,
        ),
    )(x, *weights)

    # Slice the lane-dense slab into the two reconstructions; under jit these
    # slices fuse into the consumer instead of making extra HBM passes.
    rec_one = out[:B, d["E1_off"]:d["E1_off"] + E1]
    rec_two = out[:B, d["E2_off"]:d["E2_off"] + E2]
    return rec_one, rec_two


# ---------------------------------------------------------------------------
# Init / reference
# ---------------------------------------------------------------------------
def init_params(key, d_in, shared, hidden, e1, e2):
    """Deterministic PyTorch-Linear-style init: U(-1/sqrt(fan_in), 1/sqrt(fan_in))."""
    ks = jax.random.split(key, 10)

    def linear(kw, kb, fan_in, fan_out):
        bound = 1.0 / jnp.sqrt(fan_in)
        w = jax.random.uniform(kw, (fan_in, fan_out), jnp.float32, -bound, bound)
        b = jax.random.uniform(kb, (1, fan_out), jnp.float32, -bound, bound)
        return w, b

    w_enc, b_enc = linear(ks[0], ks[1], d_in, shared)
    w1a, b1a = linear(ks[2], ks[3], shared, hidden)
    w1b, b1b = linear(ks[4], ks[5], hidden, e1)
    w2a, b2a = linear(ks[6], ks[7], shared, hidden)
    w2b, b2b = linear(ks[8], ks[9], hidden, e2)
    return dict(
        w_enc=w_enc, b_enc=b_enc,
        w1a=w1a, b1a=b1a, w1b=w1b, b1b=b1b,
        w2a=w2a, b2a=b2a, w2b=w2b, b2b=b2b,
    )


def reference_forward_bf16(x, p):
    """Pure-JAX reference with the same bf16-operand / f32-accumulate semantics."""
    bf = jnp.bfloat16

    def mm(a, w):
        return jnp.dot(a.astype(bf), w.astype(bf), preferred_element_type=jnp.float32)

    h = jnp.maximum(mm(x, p["w_enc"]) + p["b_enc"], 0.0)
    h1 = jnp.maximum(mm(h, p["w1a"]) + p["b1a"], 0.0)
    o1 = mm(h1, p["w1b"]) + p["b1b"]
    h2 = jnp.maximum(mm(h, p["w2a"]) + p["b2a"], 0.0)
    o2 = mm(h2, p["w2b"]) + p["b2b"]
    return o1, o2


# ---------------------------------------------------------------------------
# Demo / self-test
# ---------------------------------------------------------------------------
if __name__ == "__main__":
    def run_case(key, B, D_IN, SHARED, HIDDEN, E1, E2, block_rows):
        k_x, k_p = jax.random.split(key)
        x = jax.random.normal(k_x, (B, D_IN), dtype=jnp.float32)
        params = init_params(k_p, D_IN, SHARED, HIDDEN, E1, E2)
        packed = pack_params(params)

        fwd = jax.jit(lambda xx: dual_cmam_forward(xx, packed, block_rows=block_rows))
        rec_one, rec_two = fwd(x)
        jax.block_until_ready((rec_one, rec_two))

        ref_one, ref_two = reference_forward_bf16(x, params)
        assert rec_one.shape == (B, E1) and rec_two.shape == (B, E2)
        assert jnp.allclose(rec_one, ref_one, atol=1e-2, rtol=1e-2)
        assert jnp.allclose(rec_two, ref_two, atol=1e-2, rtol=1e-2)

    key = jax.random.PRNGKey(0)
    k1, k2 = jax.random.split(key)

    # Case 1: tiny hidden (H=32) -> fused block-diagonal decoder layer 2; grid=(2,).
    run_case(k1, B=32, D_IN=32, SHARED=64, HIDDEN=32, E1=48, E2=40, block_rows=16)

    # Case 2: hidden >= 128 -> split decoder layer 2 (no zero-block FLOPs);
    # non-multiple-of-8 batch exercises batch-only padding; grid=(2,).
    run_case(k2, B=24, D_IN=20, SHARED=96, HIDDEN=160, E1=130, E2=70, block_rows=1024)

    print("KERNEL_OK")
</pallas_src>

<mosaic_0001>
module attributes {stable_mosaic.version = 11 : i64} {
  func.func @dual_cmam_kernel_fused(%arg0: i32, %arg1: memref<16x32xf32, #tpu.memory_space<vmem>>, %arg2: memref<32x128xbf16, #tpu.memory_space<vmem>>, %arg3: memref<1x128xf32, #tpu.memory_space<vmem>>, %arg4: memref<128x128xbf16, #tpu.memory_space<vmem>>, %arg5: memref<1x128xf32, #tpu.memory_space<vmem>>, %arg6: memref<128x128xbf16, #tpu.memory_space<vmem>>, %arg7: memref<1x128xf32, #tpu.memory_space<vmem>>, %arg8: memref<16x128xf32, #tpu.memory_space<vmem>>) attributes {dimension_semantics = [#tpu.dimension_semantics<parallel>], iteration_bounds = array<i64: 2>, scalar_prefetch = 0 : i64, scratch_operands = 0 : i64, tpu.core_type = #tpu.core_type<tc>, window_params = [{transform_indices = @transform_0, window_bounds = array<i64: 16, 32>}, {pipeline_mode = #tpu.pipeline_mode<synchronous>, transform_indices = @transform_1, window_bounds = array<i64: 32, 128>}, {pipeline_mode = #tpu.pipeline_mode<synchronous>, transform_indices = @transform_2, window_bounds = array<i64: 1, 128>}, {pipeline_mode = #tpu.pipeline_mode<synchronous>, transform_indices = @transform_3, window_bounds = array<i64: 128, 128>}, {pipeline_mode = #tpu.pipeline_mode<synchronous>, transform_indices = @transform_4, window_bounds = array<i64: 1, 128>}, {pipeline_mode = #tpu.pipeline_mode<synchronous>, transform_indices = @transform_5, window_bounds = array<i64: 128, 128>}, {pipeline_mode = #tpu.pipeline_mode<synchronous>, transform_indices = @transform_6, window_bounds = array<i64: 1, 128>}, {transform_indices = @transform_7, window_bounds = array<i64: 16, 128>}]} {
    %c0 = arith.constant 0 : index
    %c0_0 = arith.constant 0 : index
    %0 = vector.load %arg1[%c0, %c0_0] : memref<16x32xf32, #tpu.memory_space<vmem>>, vector<16x32xf32>
    %1 = arith.truncf %0 : vector<16x32xf32> to vector<16x32xbf16>
    %c0_1 = arith.constant 0 : index
    %c0_2 = arith.constant 0 : index
    %2 = vector.load %arg2[%c0_1, %c0_2] : memref<32x128xbf16, #tpu.memory_space<vmem>>, vector<32x128xbf16>
    %cst = arith.constant dense<0.000000e+00> : vector<16x128xf32>
    %3 = tpu.matmul %1, %2, %cst {dimension_numbers = #tpu.dot_dimension_numbers<[1], [0], [0], [1], [0, 0, 1, 1], [], []>} : vector<16x32xbf16>, vector<32x128xbf16>, vector<16x128xf32> -> vector<16x128xf32>
    %c0_3 = arith.constant 0 : index
    %c0_4 = arith.constant 0 : index
    %4 = vector.load %arg3[%c0_3, %c0_4] : memref<1x128xf32, #tpu.memory_space<vmem>>, vector<1x128xf32>
    %5 = vector.broadcast %4 : vector<1x128xf32> to vector<16x128xf32>
    %6 = arith.addf %3, %5 : vector<16x128xf32>
    %cst_5 = arith.constant 0.000000e+00 : f32
    %7 = vector.broadcast %cst_5 : f32 to vector<16x128xf32>
    %8 = arith.maximumf %6, %7 : vector<16x128xf32>
    %9 = arith.truncf %8 : vector<16x128xf32> to vector<16x128xbf16>
    %c0_6 = arith.constant 0 : index
    %c0_7 = arith.constant 0 : index
    %10 = vector.load %arg4[%c0_6, %c0_7] : memref<128x128xbf16, #tpu.memory_space<vmem>>, vector<128x128xbf16>
    %cst_8 = arith.constant dense<0.000000e+00> : vector<16x128xf32>
    %11 = tpu.matmul %9, %10, %cst_8 {dimension_numbers = #tpu.dot_dimension_numbers<[1], [0], [0], [1], [0, 0, 1, 1], [], []>} : vector<16x128xbf16>, vector<128x128xbf16>, vector<16x128xf32> -> vector<16x128xf32>
    %c0_9 = arith.constant 0 : index
    %c0_10 = arith.constant 0 : index
    %12 = vector.load %arg5[%c0_9, %c0_10] : memref<1x128xf32, #tpu.memory_space<vmem>>, vector<1x128xf32>
    %13 = vector.broadcast %12 : vector<1x128xf32> to vector<16x128xf32>
    %14 = arith.addf %11, %13 : vector<16x128xf32>
    %cst_11 = arith.constant 0.000000e+00 : f32
    %15 = vector.broadcast %cst_11 : f32 to vector<16x128xf32>
    %16 = arith.maximumf %14, %15 : vector<16x128xf32>
    %17 = arith.truncf %16 : vector<16x128xf32> to vector<16x128xbf16>
    %c0_12 = arith.constant 0 : index
    %c0_13 = arith.constant 0 : index
    %18 = vector.load %arg6[%c0_12, %c0_13] : memref<128x128xbf16, #tpu.memory_space<vmem>>, vector<128x128xbf16>
    %cst_14 = arith.constant dense<0.000000e+00> : vector<16x128xf32>
    %19 = tpu.matmul %17, %18, %cst_14 {dimension_numbers = #tpu.dot_dimension_numbers<[1], [0], [0], [1], [0, 0, 1, 1], [], []>} : vector<16x128xbf16>, vector<128x128xbf16>, vector<16x128xf32> -> vector<16x128xf32>
    %c0_15 = arith.constant 0 : index
    %c0_16 = arith.constant 0 : index
    %20 = vector.load %arg7[%c0_15, %c0_16] : memref<1x128xf32, #tpu.memory_space<vmem>>, vector<1x128xf32>
    %21 = vector.broadcast %20 : vector<1x128xf32> to vector<16x128xf32>
    %22 = arith.addf %19, %21 : vector<16x128xf32>
    %c0_17 = arith.constant 0 : index
    %c0_18 = arith.constant 0 : index
    %23 = vector.load %arg8[%c0_17, %c0_18] : memref<16x128xf32, #tpu.memory_space<vmem>>, vector<16x128xf32>
    tpu.vector_store %arg8[%c0_17, %c0_18], %22 {strides = array<i32>} : memref<16x128xf32, #tpu.memory_space<vmem>>, vector<16x128xf32>,
    return
  }
  func.func @transform_0(%arg0: i32) -> (i32, i32) {
    %c0_i32 = arith.constant 0 : i32
    %c0_i32_0 = arith.constant 0 : i32
    return %arg0, %c0_i32 : i32, i32
  }
  func.func @transform_1(%arg0: i32) -> (i32, i32) {
    %c0_i32 = arith.constant 0 : i32
    %c0_i32_0 = arith.constant 0 : i32
    %c0_i32_1 = arith.constant 0 : i32
    return %c0_i32, %c0_i32_0 : i32, i32
  }
  func.func @transform_2(%arg0: i32) -> (i32, i32) {
    %c0_i32 = arith.constant 0 : i32
    %c0_i32_0 = arith.constant 0 : i32
    %c0_i32_1 = arith.constant 0 : i32
    return %c0_i32, %c0_i32_0 : i32, i32
  }
  func.func @transform_3(%arg0: i32) -> (i32, i32) {
    %c0_i32 = arith.constant 0 : i32
    %c0_i32_0 = arith.constant 0 : i32
    %c0_i32_1 = arith.constant 0 : i32
    return %c0_i32, %c0_i32_0 : i32, i32
  }
  func.func @transform_4(%arg0: i32) -> (i32, i32) {
    %c0_i32 = arith.constant 0 : i32
    %c0_i32_0 = arith.constant 0 : i32
    %c0_i32_1 = arith.constant 0 : i32
    return %c0_i32, %c0_i32_0 : i32, i32
  }
  func.func @transform_5(%arg0: i32) -> (i32, i32) {
    %c0_i32 = arith.constant 0 : i32
    %c0_i32_0 = arith.constant 0 : i32
    %c0_i32_1 = arith.constant 0 : i32
    return %c0_i32, %c0_i32_0 : i32, i32
  }
  func.func @transform_6(%arg0: i32) -> (i32, i32) {
    %c0_i32 = arith.constant 0 : i32
    %c0_i32_0 = arith.constant 0 : i32
    %c0_i32_1 = arith.constant 0 : i32
    return %c0_i32, %c0_i32_0 : i32, i32
  }
  func.func @transform_7(%arg0: i32) -> (i32, i32) {
    %c0_i32 = arith.constant 0 : i32
    %c0_i32_0 = arith.constant 0 : i32
    return %arg0, %c0_i32 : i32, i32
  }
}

</mosaic_0001>

<llo_original>
// kernel: _lambda_.1
$region0: #{_lambda_.1}
  #allocation0 [shape = 'u32[]', space=smem, size = 0x4, offset = 0x4, fixed_abs, tag = 'smem constant byte address 0x4 - core index']
  #allocation1 [shape = 'u32[144,128]{1,0:T(1,128)}', space=vmem, size = 0x12000, scoped, tag = 'internal scratch']
  %s0 = inlined_call_operand.hbm [shape: f32[32,32], index: 0, kind: input, shape index: {}]
  %s1 = inlined_call_operand.vmem [shape: bf16[32,128], index: 1, kind: input, shape index: {}]
  %s2 = inlined_call_operand.vmem [shape: f32[1,128], index: 2, kind: input, shape index: {}]
  %s3 = inlined_call_operand.hbm [shape: bf16[128,128], index: 3, kind: input, shape index: {}]
  %s4 = inlined_call_operand.vmem [shape: f32[1,128], index: 4, kind: input, shape index: {}]
  %s5 = inlined_call_operand.hbm [shape: bf16[128,128], index: 5, kind: input, shape index: {}]
  %s6 = inlined_call_operand.vmem [shape: f32[1,128], index: 6, kind: input, shape index: {}]
  %s7 = inlined_call_operand.vmem [shape: f32[32,128], index: 7, kind: output, shape index: {}]
  %s8 = sld [smem:[#allocation0]]
  $region73: #{_lambda_.1} parent=0
    _
  %s10 = ssub.s32 1, %s8
  %s11 = scalar_select 0, %s10, %s8
  $region1: #{_lambda_.1} parent=0
    #allocation2 [shape = 'u8[16384]{0}', space=vmem, size = 0x4000, scoped, tag = 'input window, operand 0']
    #allocation3 [shape = 's32[2]{0}', space=sflag, size = 0x8, scoped, tag = 'scoped memory for _lambda_.1']
    #allocation4 [shape = 'u8[32768]{0}', space=vmem, size = 0x8000, scoped, tag = 'input window, operand 3, single buffered']
    #allocation5 [shape = 's32[1]{0}', space=sflag, size = 0x4, scoped, tag = 'scoped memory for _lambda_.1']
    #allocation6 [shape = 'u8[32768]{0}', space=vmem, size = 0x8000, scoped, tag = 'input window, operand 5, single buffered']
    %12 = vsyncpa [#allocation3], 0
    %s13 = scalar_lea.sflag [#allocation3], 1
    %14 = vsyncpa %s13, 0
    %15 = vsyncpa [#allocation5], 0
    loop: start=0, step=1, limit=4
    $region2: #{_lambda_.1} parent=1 // loop_pre_header
      _
    $region3: #{_lambda_.1} parent=1 // loop_header
      %s17 = sphi 0, %s21
      %p18 = scmp.ge.s32.totalorder %s17, 4
      %s27 = sphi 0, %s29
      %s30 = sphi 0, %s27
      %s31 = sphi 0, %s30
      %s47 = sphi 0, %s31
      %s51 = sphi 0, %s51
      %s53 = sphi 0, %s51
      %s54 = sphi 0, %s53
      %s68 = sphi 0, %s54
      %s72 = sphi 0, %s72
      %s74 = sphi 0, %s72
      %s75 = sphi 0, %s74
      %s89 = sphi 0, %s75
      %s93 = sphi 0, %s93
      %s95 = sphi 0, %s93
      %s96 = sphi 0, %s95
      %s110 = sphi 0, %s96
      %s114 = sphi 0, %s114
      %s116 = sphi 0, %s114
      %s117 = sphi 0, %s116
      %s131 = sphi 0, %s117
      %s135 = sphi 0, %s135
      %s137 = sphi 0, %s135
      %s138 = sphi 0, %s137
      %s152 = sphi 0, %s138
      %s156 = sphi 0, %s156
      %s158 = sphi 0, %s156
      %s159 = sphi 0, %s158
      %s173 = sphi 0, %s159
      %s179 = sphi 0, %s181
      %s182 = sphi 0, %s179
      %s183 = sphi 0, %s182
      %s199 = sphi 0, %s183
    $region4: #{_lambda_.1} parent=1 // loop_header_branch
      %20 = sbr.rel (%p18) target = $region8
    $region5: #{_lambda_.1} parent=1 // loop_body
      %s22 = ssub.s32 %s17, 1
      %s23 = ssub.s32 %s17, 2
      %s24 = sadd.s32 %s17, 1
      %s25 = ssub.s32 %s17, %s24
      %p26 = scmp.eq.s32.totalorder %s25, 0
      %s28 = sadd.s32 %s27, 1
      %s29 = scalar_select %p26, %s27, %s28
      %p32 = pneg %p26
      %p33 = scmp.eq.s32.totalorder %s17, 1
      %p34 = por %p32, %p33
      %p35 = scmp.ne.s32.totalorder %s27, %s30
      %p36 = scmp.eq.s32.totalorder %s17, 0
      %p37 = por %p35, %p36
      %p38 = scmp.ne.s32.totalorder %s27, %s30
      %p39 = scmp.eq.s32.totalorder %s22, 1
      %p40 = por %p38, %p39
      %p41 = scmp.ne.s32.totalorder %s30, %s31
      %p42 = scmp.eq.s32.totalorder %s22, 0
      %p43 = por %p41, %p42
      %p44 = scmp.ne.s32.totalorder %s30, %s31
      %p45 = scmp.eq.s32.totalorder %s23, 1
      %p46 = por %p44, %p45
      %p48 = scmp.ne.s32.totalorder %s31, %s47
      %p49 = scmp.eq.s32.totalorder %s23, 0
      %p50 = por %p48, %p49
      %s52 = sadd.s32 %s51, 1
      %p55 = scmp.eq.s32.totalorder %s17, 1
      %p56 = scmp.ne.s32.totalorder %s51, %s53
      %p57 = scmp.eq.s32.totalorder %s17, 0
      %p58 = por %p56, %p57
      %p59 = scmp.ne.s32.totalorder %s51, %s53
      %p60 = scmp.eq.s32.totalorder %s22, 1
      %p61 = por %p59, %p60
      %p62 = scmp.ne.s32.totalorder %s53, %s54
      %p63 = scmp.eq.s32.totalorder %s22, 0
      %p64 = por %p62, %p63
      %p65 = scmp.ne.s32.totalorder %s53, %s54
      %p66 = scmp.eq.s32.totalorder %s23, 1
      %p67 = por %p65, %p66
      %p69 = scmp.ne.s32.totalorder %s54, %s68
      %p70 = scmp.eq.s32.totalorder %s23, 0
      %p71 = por %p69, %p70
      %s73 = sadd.s32 %s72, 1
      %p76 = scmp.eq.s32.totalorder %s17, 1
      %p77 = scmp.ne.s32.totalorder %s72, %s74
      %p78 = scmp.eq.s32.totalorder %s17, 0
      %p79 = por %p77, %p78
      %p80 = scmp.ne.s32.totalorder %s72, %s74
      %p81 = scmp.eq.s32.totalorder %s22, 1
      %p82 = por %p80, %p81
      %p83 = scmp.ne.s32.totalorder %s74, %s75
      %p84 = scmp.eq.s32.totalorder %s22, 0
      %p85 = por %p83, %p84
      %p86 = scmp.ne.s32.totalorder %s74, %s75
      %p87 = scmp.eq.s32.totalorder %s23, 1
      %p88 = por %p86, %p87
      %p90 = scmp.ne.s32.totalorder %s75, %s89
      %p91 = scmp.eq.s32.totalorder %s23, 0
      %p92 = por %p90, %p91
      %s94 = sadd.s32 %s93, 1
      %p97 = scmp.eq.s32.totalorder %s17, 1
      %p98 = scmp.ne.s32.totalorder %s93, %s95
      %p99 = scmp.eq.s32.totalorder %s17, 0
      %p100 = por %p98, %p99
      %p101 = scmp.ne.s32.totalorder %s93, %s95
      %p102 = scmp.eq.s32.totalorder %s22, 1
      %p103 = por %p101, %p102
      %p104 = scmp.ne.s32.totalorder %s95, %s96
      %p105 = scmp.eq.s32.totalorder %s22, 0
      %p106 = por %p104, %p105
      %p107 = scmp.ne.s32.totalorder %s95, %s96
      %p108 = scmp.eq.s32.totalorder %s23, 1
      %p109 = por %p107, %p108
      %p111 = scmp.ne.s32.totalorder %s96, %s110
      %p112 = scmp.eq.s32.totalorder %s23, 0
      %p113 = por %p111, %p112
      %s115 = sadd.s32 %s114, 1
      %p118 = scmp.eq.s32.totalorder %s17, 1
      %p119 = scmp.ne.s32.totalorder %s114, %s116
      %p120 = scmp.eq.s32.totalorder %s17, 0
      %p121 = por %p119, %p120
      %p122 = scmp.ne.s32.totalorder %s114, %s116
      %p123 = scmp.eq.s32.totalorder %s22, 1
      %p124 = por %p122, %p123
      %p125 = scmp.ne.s32.totalorder %s116, %s117
      %p126 = scmp.eq.s32.totalorder %s22, 0
      %p127 = por %p125, %p126
      %p128 = scmp.ne.s32.totalorder %s116, %s117
      %p129 = scmp.eq.s32.totalorder %s23, 1
      %p130 = por %p128, %p129
      %p132 = scmp.ne.s32.totalorder %s117, %s131
      %p133 = scmp.eq.s32.totalorder %s23, 0
      %p134 = por %p132, %p133
      %s136 = sadd.s32 %s135, 1
      %p139 = scmp.eq.s32.totalorder %s17, 1
      %p140 = scmp.ne.s32.totalorder %s135, %s137
      %p141 = scmp.eq.s32.totalorder %s17, 0
      %p142 = por %p140, %p141
      %p143 = scmp.ne.s32.totalorder %s135, %s137
      %p144 = scmp.eq.s32.totalorder %s22, 1
      %p145 = por %p143, %p144
      %p146 = scmp.ne.s32.totalorder %s137, %s138
      %p147 = scmp.eq.s32.totalorder %s22, 0
      %p148 = por %p146, %p147
      %p149 = scmp.ne.s32.totalorder %s137, %s138
      %p150 = scmp.eq.s32.totalorder %s23, 1
      %p151 = por %p149, %p150
      %p153 = scmp.ne.s32.totalorder %s138, %s152
      %p154 = scmp.eq.s32.totalorder %s23, 0
      %p155 = por %p153, %p154
      %s157 = sadd.s32 %s156, 1
      %p160 = scmp.eq.s32.totalorder %s17, 1
      %p161 = scmp.ne.s32.totalorder %s156, %s158
      %p162 = scmp.eq.s32.totalorder %s17, 0
      %p163 = por %p161, %p162
      %p164 = scmp.ne.s32.totalorder %s156, %s158
      %p165 = scmp.eq.s32.totalorder %s22, 1
      %p166 = por %p164, %p165
      %p167 = scmp.ne.s32.totalorder %s158, %s159
      %p168 = scmp.eq.s32.totalorder %s22, 0
      %p169 = por %p167, %p168
      %p170 = scmp.ne.s32.totalorder %s158, %s159
      %p171 = scmp.eq.s32.totalorder %s23, 1
      %p172 = por %p170, %p171
      %p174 = scmp.ne.s32.totalorder %s159, %s173
      %p175 = scmp.eq.s32.totalorder %s23, 0
      %p176 = por %p174, %p175
      %s177 = ssub.s32 %s17, %s24
      %p178 = scmp.eq.s32.totalorder %s177, 0
      %s180 = sadd.s32 %s179, 1
      %s181 = scalar_select %p178, %s179, %s180
      %p184 = pneg %p178
      %p185 = scmp.eq.s32.totalorder %s17, 1
      %p186 = por %p184, %p185
      %p187 = scmp.ne.s32.totalorder %s179, %s182
      %p188 = scmp.eq.s32.totalorder %s17, 0
      %p189 = por %p187, %p188
      %p190 = scmp.ne.s32.totalorder %s179, %s182
      %p191 = scmp.eq.s32.totalorder %s22, 1
      %p192 = por %p190, %p191
      %p193 = scmp.ne.s32.totalorder %s182, %s183
      %p194 = scmp.eq.s32.totalorder %s22, 0
      %p195 = por %p193, %p194
      %p196 = scmp.ne.s32.totalorder %s182, %s183
      %p197 = scmp.eq.s32.totalorder %s23, 1
      %p198 = por %p196, %p197
      %p200 = scmp.ne.s32.totalorder %s183, %s199
      %p201 = scmp.eq.s32.totalorder %s23, 0
      %p202 = por %p200, %p201
      %p203 = scmp.le.s32.totalorder 1, %s17
      %p204 = scmp.lt.s32.totalorder %s17, 3
      %p205 = pnand %p203, %p204
      %p206 = pneg %p205
      // Predicated region
      $region9: #{_lambda_.1} parent=5 // pred_check
        _
      $region10: #{_lambda_.1} parent=5 // pred_check_branch
        %208 = sbr.rel (%p205) target = $region12
      $region11: #{_lambda_.1} parent=5 // pred_region
        %s209 = ssub.s32 %s17, 1
        // Predicated region
        $region13: #{_lambda_.1} parent=11 // pred_check
          %p210 = pneg %p64
        $region14: #{_lambda_.1} parent=11 // pred_check_branch
          %212 = sbr.rel (%p210) target = $region16
        $region15: #{_lambda_.1} parent=11 // pred_region
          _
        $region16: #{_lambda_.1} parent=11 // pred_fallthru
          _
        // Predicated region
        $region17: #{_lambda_.1} parent=11 // pred_check
          %p213 = pneg %p85
        $region18: #{_lambda_.1} parent=11 // pred_check_branch
          %215 = sbr.rel (%p213) target = $region20
        $region19: #{_lambda_.1} parent=11 // pred_region
          _
        $region20: #{_lambda_.1} parent=11 // pred_fallthru
          _
        // Predicated region
        $region21: #{_lambda_.1} parent=11 // pred_check
          %p216 = pneg %p106
        $region22: #{_lambda_.1} parent=11 // pred_check_branch
          %218 = sbr.rel (%p216) target = $region24
        $region23: #{_lambda_.1} parent=11 // pred_region
          %s220 = ssub.s32 1024, 1024
          %221 = vsyncadd [#allocation5], %s220
          %s222 = sshll.u32 [#allocation4], 4
          %s223 = int_to_ptr.vmem [resolvable:$true] %s222
          %228 = dma.hbm_to_vmem [thread:$0]  %s3, 1024, %s223, [#allocation5], 64, 64, 4
        $region24: #{_lambda_.1} parent=11 // pred_fallthru
          _
        // Predicated region
        $region25: #{_lambda_.1} parent=11 // pred_check
          %p229 = pneg %p127
        $region26: #{_lambda_.1} parent=11 // pred_check_branch
          %231 = sbr.rel (%p229) target = $region28
        $region27: #{_lambda_.1} parent=11 // pred_region
          _
        $region28: #{_lambda_.1} parent=11 // pred_fallthru
          _
        // Predicated region
        $region29: #{_lambda_.1} parent=11 // pred_check
          %p232 = pneg %p148
        $region30: #{_lambda_.1} parent=11 // pred_check_branch
          %234 = sbr.rel (%p232) target = $region32
        $region31: #{_lambda_.1} parent=11 // pred_region
          %s236 = ssub.s32 1024, 1024
          %237 = vsyncadd [#allocation5], %s236
          %s238 = sshll.u32 [#allocation6], 4
          %s239 = int_to_ptr.vmem [resolvable:$true] %s238
          %244 = dma.hbm_to_vmem [thread:$0]  %s5, 1024, %s239, [#allocation5], 64, 64, 4
        $region32: #{_lambda_.1} parent=11 // pred_fallthru
          _
        // Predicated region
        $region33: #{_lambda_.1} parent=11 // pred_check
          %p245 = pneg %p169
        $region34: #{_lambda_.1} parent=11 // pred_check_branch
          %247 = sbr.rel (%p245) target = $region36
        $region35: #{_lambda_.1} parent=11 // pred_region
          _
        $region36: #{_lambda_.1} parent=11 // pred_fallthru
          _
      $region12: #{_lambda_.1} parent=5 // pred_fallthru
        _
      %p248 = scmp.lt.s32.totalorder %s17, 2
      // Predicated region
      $region37: #{_lambda_.1} parent=5 // pred_check
        %p249 = pneg %p248
      $region38: #{_lambda_.1} parent=5 // pred_check_branch
        %251 = sbr.rel (%p249) target = $region40
      $region39: #{_lambda_.1} parent=5 // pred_region
        // Predicated region
        $region41: #{_lambda_.1} parent=39 // pred_check
          %p252 = pneg %p37
        $region42: #{_lambda_.1} parent=39 // pred_check_branch
          %254 = sbr.rel (%p252) target = $region44
        $region43: #{_lambda_.1} parent=39 // pred_region
          %s255 = sand.u32 %s27, 1
          %s256 = scalar_lea.sflag [#allocation3], %s255
          %s257 = sand.u32 %s27, 1
          %s258 = smul.addr %s257, 16
          %s259 = scalar_lea.vmem [#allocation2], %s258
          %s260 = smul.u32 2, %s17
          %s262 = ssub.s32 256, 256
          %263 = vsyncadd %s256, %s262
          %s264 = smul.addr %s260, 128
          %s265 = scalar_lea.hbm %s0, %s264
          %s266 = sshll.u32 %s259, 4
          %s267 = int_to_ptr.vmem [resolvable:$true] %s266
          %272 = dma.hbm_to_vmem [thread:$0]  %s265, 256, %s267, %s256, 128, 128, 8
        $region44: #{_lambda_.1} parent=39 // pred_fallthru
          _
      $region40: #{_lambda_.1} parent=5 // pred_fallthru
        _
      %p273 = scmp.le.s32.totalorder 1, %s17
      %p274 = scmp.lt.s32.totalorder %s17, 3
      %p275 = pnand %p273, %p274
      %p276 = pneg %p275
      // Predicated region
      $region45: #{_lambda_.1} parent=5 // pred_check
        _
      $region46: #{_lambda_.1} parent=5 // pred_check_branch
        %278 = sbr.rel (%p275) target = $region48
      $region47: #{_lambda_.1} parent=5 // pred_region
        %s279 = ssub.s32 %s17, 1
        %s280 = sand.u32 %s30, 1
        %s281 = scalar_lea.sflag [#allocation3], %s280
        %s282 = sand.u32 %s30, 1
        %s283 = smul.addr %s282, 16
        %s284 = scalar_lea.vmem [#allocation2], %s283
        // Predicated region
        $region49: #{_lambda_.1} parent=47 // pred_check
          %p285 = pneg %p43
        $region50: #{_lambda_.1} parent=47 // pred_check_branch
          %287 = sbr.rel (%p285) target = $region52
        $region51: #{_lambda_.1} parent=47 // pred_region
          %288 = dma.done %s281, 256
        $region52: #{_lambda_.1} parent=47 // pred_fallthru
          _
        // Predicated region
        $region53: #{_lambda_.1} parent=47 // pred_check
          %p289 = pneg %p106
        $region54: #{_lambda_.1} parent=47 // pred_check_branch
          %291 = sbr.rel (%p289) target = $region56
        $region55: #{_lambda_.1} parent=47 // pred_region
          %292 = dma.done [#allocation5], 1024
        $region56: #{_lambda_.1} parent=47 // pred_fallthru
          _
        // Predicated region
        $region57: #{_lambda_.1} parent=47 // pred_check
          %p293 = pneg %p148
        $region58: #{_lambda_.1} parent=47 // pred_check_branch
          %295 = sbr.rel (%p293) target = $region60
        $region59: #{_lambda_.1} parent=47 // pred_region
          %296 = dma.done [#allocation5], 1024
        $region60: #{_lambda_.1} parent=47 // pred_fallthru
          _
        %s297 = sand.u32 %s30, 1
        %s298 = scalar_lea.sflag [#allocation3], %s297
        %s299 = sand.u32 %s30, 1
        %s300 = smul.addr %s299, 16
        %s301 = scalar_lea.vmem [#allocation2], %s300
        %p302 = pneg %p43
        %p303 = pneg %p40
        %p304 = pneg %p64
        %p305 = pneg %p61
        %p306 = pneg %p85
        %p307 = pneg %p82
        %p308 = pneg %p106
        %p309 = pneg %p103
        %p310 = pneg %p127
        %p311 = pneg %p124
        %p312 = pneg %p148
        %p313 = pneg %p145
        %p314 = pneg %p169
        %p315 = pneg %p166
        %p316 = pneg %p195
        %p317 = pneg %p192
        %s318 = smul.u32 2, %s22
        %p319 = scmp.lt.s32.totalorder %s318, 3
        %s320 = scalar_select %p319, %s318, 3
        %s321 = smul.addr %s320, 8
        %s322 = scalar_lea.vmem %s7, %s321
        %s323 = smul.u32 2, %s22
        %s324 = smul.u32 2, %s22
        %p325 = scmp.lt.s32.totalorder %s324, 3
        %s326 = scalar_select %p325, %s324, 3
        %s327 = smul.addr %s326, 8
        %s328 = scalar_lea.vmem %s7, %s327
        %s329 = smul.u32 2, %s22
        %v331 = vld [vmem:[%s284] sm:$0xff]
        %v332 = vld [vmem:[%s284 + $0x8] sm:$0xff]
        %v333 = vpack.c.bf16 %v332, %v331
        %v334 = vld [vmem:[%s1] sm:$0xf]
        %v335 = vld [vmem:[%s1 + $0x4] sm:$0xf]
        %v336 = vld [vmem:[%s1 + $0x8] sm:$0xf]
        %v337 = vld [vmem:[%s1 + $0xc] sm:$0xf]
        %v338 = vld [vmem:[%s2] sm:$0x1]
        %v340 = vlaneseq
        %v341 = vshrl.u32 %v340, 7
        %v342 = vsub.s32 0, %v341
        %v343 = vrot.slane %v338, %v342
        %v349 = vunpack.c.l.b16 %v334
        %v350 = vunpack.c.l.b16 %v335
        %v351 = vunpack.c.l.b16 %v336
        %v352 = vunpack.c.l.b16 %v337
        %v353 = vpack.c.b16 %v350, %v349
        %v354 = vpack.c.b16 %v352, %v351
        %vm357 = vcmask 261120
        %v359 = vsel %vm357, %v333, 0
        %361 = vmatprep.subr.bf16.mxu0 0
        %362 = vmatpush1.bf16.msra.mxu0 %v353
        %363 = vmatprep.subr.bf16.mxu0 0
        %364 = vmatpush1.bf16.msra.mxu0 %v354
        %365 = vmatprep.subr.bf16.mxu0 0
        %366 = vmatpush1.bf16.msra.mxu0 0
        %367 = vmatprep.subr.bf16.mxu0 0
        %368 = vmatpush1.bf16.msra.mxu0 0
        %369 = vmatprep.subr.bf16.mxu0 0
        %370 = vmatpush1.bf16.msra.mxu0 0
        %371 = vmatprep.subr.bf16.mxu0 0
        %372 = vmatpush1.bf16.msra.mxu0 0
        %373 = vmatprep.subr.bf16.mxu0 0
        %374 = vmatpush1.bf16.msra.mxu0 0
        %375 = vmatprep.subr.bf16.mxu0 0
        %376 = vmatpush1.bf16.msra.mxu0 0
        %377 = vmatprep.subr.bf16.mxu0 0
        %378 = vmatpush1.bf16.msra.mxu0 0
        %379 = vmatprep.subr.bf16.mxu0 0
        %380 = vmatpush1.bf16.msra.mxu0 0
        %381 = vmatprep.subr.bf16.mxu0 0
        %382 = vmatpush1.bf16.msra.mxu0 0
        %383 = vmatprep.subr.bf16.mxu0 0
        %384 = vmatpush1.bf16.msra.mxu0 0
        %385 = vmatprep.subr.bf16.mxu0 0
        %386 = vmatpush1.bf16.msra.mxu0 0
        %387 = vmatprep.subr.bf16.mxu0 0
        %388 = vmatpush1.bf16.msra.mxu0 0
        %389 = vmatprep.subr.bf16.mxu0 0
        %390 = vmatpush1.bf16.msra.mxu0 0
        %391 = vmatprep.subr.bf16.mxu0 0
        %392 = vmatpush1.bf16.msra.mxu0 0
        %393 = vmatprep.mubr.bf16.mxu0 0
        %394 = vmatmul.mubr.bf16.gmra.mrb[0].mxu0 %v359
        %v395 = vpop.f32.mrb[0].mxu0
        %v396 = vadd.f32 %v343, %v395
        %v397 = vpop.f32.mrb[0].mxu0
        %v398 = vpop.f32.mrb[0].mxu0
        %v399 = vadd.f32 %v343, %v398
        %v400 = vpop.f32.mrb[0].mxu0
        %401 = vdwg.mxu0
        %v402 = vmax.f32 %v396, 0.0
        %v403 = vmax.f32 %v399, 0.0
        %v404 = vpack.c.bf16 %v403, %v402
        %v405 = vld [vmem:[#allocation4] sm:$0xf]
        %v406 = vld [vmem:[#allocation4 + $0x4] sm:$0xf]
        %v407 = vld [vmem:[#allocation4 + $0x8] sm:$0xf]
        %v408 = vld [vmem:[#allocation4 + $0xc] sm:$0xf]
        %v409 = vld [vmem:[#allocation4 + $0x10] sm:$0xf]
        %v410 = vld [vmem:[#allocation4 + $0x14] sm:$0xf]
        %v411 = vld [vmem:[#allocation4 + $0x18] sm:$0xf]
        %v412 = vld [vmem:[#allocation4 + $0x1c] sm:$0xf]
        %v413 = vld [vmem:[#allocation4 + $0x20] sm:$0xf]
        %v414 = vld [vmem:[#allocation4 + $0x24] sm:$0xf]
        %v415 = vld [vmem:[#allocation4 + $0x28] sm:$0xf]
        %v416 = vld [vmem:[#allocation4 + $0x2c] sm:$0xf]
        %v417 = vld [vmem:[#allocation4 + $0x30] sm:$0xf]
        %v418 = vld [vmem:[#allocation4 + $0x34] sm:$0xf]
        %v419 = vld [vmem:[#allocation4 + $0x38] sm:$0xf]
        %v420 = vld [vmem:[#allocation4 + $0x3c] sm:$0xf]
        %v421 = vld [vmem:[%s4] sm:$0x1]
        %v423 = vlaneseq
        %v424 = vshrl.u32 %v423, 7
        %v425 = vsub.s32 0, %v424
        %v426 = vrot.slane %v421, %v425
        %v444 = vunpack.c.l.b16 %v405
        %v445 = vunpack.c.l.b16 %v406
        %v446 = vunpack.c.l.b16 %v407
        %v447 = vunpack.c.l.b16 %v408
        %v448 = vunpack.c.l.b16 %v409
        %v449 = vunpack.c.l.b16 %v410
        %v450 = vunpack.c.l.b16 %v411
        %v451 = vunpack.c.l.b16 %v412
        %v452 = vunpack.c.l.b16 %v413
        %v453 = vunpack.c.l.b16 %v414
        %v454 = vunpack.c.l.b16 %v415
        %v455 = vunpack.c.l.b16 %v416
        %v456 = vunpack.c.l.b16 %v417
        %v457 = vunpack.c.l.b16 %v418
        %v458 = vunpack.c.l.b16 %v419
        %v459 = vunpack.c.l.b16 %v420
        %v460 = vpack.c.b16 %v445, %v444
        %v461 = vpack.c.b16 %v447, %v446
        %v462 = vpack.c.b16 %v449, %v448
        %v463 = vpack.c.b16 %v451, %v450
        %v464 = vpack.c.b16 %v453, %v452
        %v465 = vpack.c.b16 %v455, %v454
        %v466 = vpack.c.b16 %v457, %v456
        %v467 = vpack.c.b16 %v459, %v458
        %476 = vmatprep.subr.bf16.mxu0 0
        %477 = vmatpush1.bf16.msra.mxu0 %v460
        %478 = vmatprep.subr.bf16.mxu0 0
        %479 = vmatpush1.bf16.msra.mxu0 %v461
        %480 = vmatprep.subr.bf16.mxu0 0
        %481 = vmatpush1.bf16.msra.mxu0 %v462
        %482 = vmatprep.subr.bf16.mxu0 0
        %483 = vmatpush1.bf16.msra.mxu0 %v463
        %484 = vmatprep.subr.bf16.mxu0 0
        %485 = vmatpush1.bf16.msra.mxu0 %v464
        %486 = vmatprep.subr.bf16.mxu0 0
        %487 = vmatpush1.bf16.msra.mxu0 %v465
        %488 = vmatprep.subr.bf16.mxu0 0
        %489 = vmatpush1.bf16.msra.mxu0 %v466
        %490 = vmatprep.subr.bf16.mxu0 0
        %491 = vmatpush1.bf16.msra.mxu0 %v467
        %492 = vmatprep.subr.bf16.mxu0 0
        %493 = vmatpush1.bf16.msra.mxu0 0
        %494 = vmatprep.subr.bf16.mxu0 0
        %495 = vmatpush1.bf16.msra.mxu0 0
        %496 = vmatprep.subr.bf16.mxu0 0
        %497 = vmatpush1.bf16.msra.mxu0 0
        %498 = vmatprep.subr.bf16.mxu0 0
        %499 = vmatpush1.bf16.msra.mxu0 0
        %500 = vmatprep.subr.bf16.mxu0 0
        %501 = vmatpush1.bf16.msra.mxu0 0
        %502 = vmatprep.subr.bf16.mxu0 0
        %503 = vmatpush1.bf16.msra.mxu0 0
        %504 = vmatprep.subr.bf16.mxu0 0
        %505 = vmatpush1.bf16.msra.mxu0 0
        %506 = vmatprep.subr.bf16.mxu0 0
        %507 = vmatpush1.bf16.msra.mxu0 0
        %508 = vmatprep.mubr.bf16.mxu0 0
        %509 = vmatmul.mubr.bf16.gmra.mrb[0].mxu0 %v404
        %v510 = vpop.f32.mrb[0].mxu0
        %v511 = vadd.f32 %v426, %v510
        %v512 = vpop.f32.mrb[0].mxu0
        %v513 = vpop.f32.mrb[0].mxu0
        %v514 = vadd.f32 %v426, %v513
        %v515 = vpop.f32.mrb[0].mxu0
        %516 = vdwg.mxu0
        %v517 = vmax.f32 %v511, 0.0
        %v518 = vmax.f32 %v514, 0.0
        %v519 = vpack.c.bf16 %v518, %v517
        %v520 = vld [vmem:[#allocation6] sm:$0xf]
        %v521 = vld [vmem:[#allocation6 + $0x4] sm:$0xf]
        %v522 = vld [vmem:[#allocation6 + $0x8] sm:$0xf]
        %v523 = vld [vmem:[#allocation6 + $0xc] sm:$0xf]
        %v524 = vld [vmem:[#allocation6 + $0x10] sm:$0xf]
        %v525 = vld [vmem:[#allocation6 + $0x14] sm:$0xf]
        %v526 = vld [vmem:[#allocation6 + $0x18] sm:$0xf]
        %v527 = vld [vmem:[#allocation6 + $0x1c] sm:$0xf]
        %v528 = vld [vmem:[#allocation6 + $0x20] sm:$0xf]
        %v529 = vld [vmem:[#allocation6 + $0x24] sm:$0xf]
        %v530 = vld [vmem:[#allocation6 + $0x28] sm:$0xf]
        %v531 = vld [vmem:[#allocation6 + $0x2c] sm:$0xf]
        %v532 = vld [vmem:[#allocation6 + $0x30] sm:$0xf]
        %v533 = vld [vmem:[#allocation6 + $0x34] sm:$0xf]
        %v534 = vld [vmem:[#allocation6 + $0x38] sm:$0xf]
        %v535 = vld [vmem:[#allocation6 + $0x3c] sm:$0xf]
        %v536 = vld [vmem:[%s6] sm:$0x1]
        %v538 = vlaneseq
        %v539 = vshrl.u32 %v538, 7
        %v540 = vsub.s32 0, %v539
        %v541 = vrot.slane %v536, %v540
        %v559 = vunpack.c.l.b16 %v520
        %v560 = vunpack.c.l.b16 %v521
        %v561 = vunpack.c.l.b16 %v522
        %v562 = vunpack.c.l.b16 %v523
        %v563 = vunpack.c.l.b16 %v524
        %v564 = vunpack.c.l.b16 %v525
        %v565 = vunpack.c.l.b16 %v526
        %v566 = vunpack.c.l.b16 %v527
        %v567 = vunpack.c.l.b16 %v528
        %v568 = vunpack.c.l.b16 %v529
        %v569 = vunpack.c.l.b16 %v530
        %v570 = vunpack.c.l.b16 %v531
        %v571 = vunpack.c.l.b16 %v532
        %v572 = vunpack.c.l.b16 %v533
        %v573 = vunpack.c.l.b16 %v534
        %v574 = vunpack.c.l.b16 %v535
        %v575 = vpack.c.b16 %v560, %v559
        %v576 = vpack.c.b16 %v562, %v561
        %v577 = vpack.c.b16 %v564, %v563
        %v578 = vpack.c.b16 %v566, %v565
        %v579 = vpack.c.b16 %v568, %v567
        %v580 = vpack.c.b16 %v570, %v569
        %v581 = vpack.c.b16 %v572, %v571
        %v582 = vpack.c.b16 %v574, %v573
        %591 = vmatprep.subr.bf16.mxu0 0
        %592 = vmatpush1.bf16.msra.mxu0 %v575
        %593 = vmatprep.subr.bf16.mxu0 0
        %594 = vmatpush1.bf16.msra.mxu0 %v576
        %595 = vmatprep.subr.bf16.mxu0 0
        %596 = vmatpush1.bf16.msra.mxu0 %v577
        %597 = vmatprep.subr.bf16.mxu0 0
        %598 = vmatpush1.bf16.msra.mxu0 %v578
        %599 = vmatprep.subr.bf16.mxu0 0
        %600 = vmatpush1.bf16.msra.mxu0 %v579
        %601 = vmatprep.subr.bf16.mxu0 0
        %602 = vmatpush1.bf16.msra.mxu0 %v580
        %603 = vmatprep.subr.bf16.mxu0 0
        %604 = vmatpush1.bf16.msra.mxu0 %v581
        %605 = vmatprep.subr.bf16.mxu0 0
        %606 = vmatpush1.bf16.msra.mxu0 %v582
        %607 = vmatprep.subr.bf16.mxu0 0
        %608 = vmatpush1.bf16.msra.mxu0 0
        %609 = vmatprep.subr.bf16.mxu0 0
        %610 = vmatpush1.bf16.msra.mxu0 0
        %611 = vmatprep.subr.bf16.mxu0 0
        %612 = vmatpush1.bf16.msra.mxu0 0
        %613 = vmatprep.subr.bf16.mxu0 0
        %614 = vmatpush1.bf16.msra.mxu0 0
        %615 = vmatprep.subr.bf16.mxu0 0
        %616 = vmatpush1.bf16.msra.mxu0 0
        %617 = vmatprep.subr.bf16.mxu0 0
        %618 = vmatpush1.bf16.msra.mxu0 0
        %619 = vmatprep.subr.bf16.mxu0 0
        %620 = vmatpush1.bf16.msra.mxu0 0
        %621 = vmatprep.subr.bf16.mxu0 0
        %622 = vmatpush1.bf16.msra.mxu0 0
        %623 = vmatprep.mubr.bf16.mxu0 0
        %624 = vmatmul.mubr.bf16.gmra.mrb[0].mxu0 %v519
        %v625 = vpop.f32.mrb[0].mxu0
        %v626 = vadd.f32 %v541, %v625
        %v627 = vpop.f32.mrb[0].mxu0
        %v628 = vpop.f32.mrb[0].mxu0
        %v629 = vadd.f32 %v541, %v628
        %v630 = vpop.f32.mrb[0].mxu0
        %631 = vdwg.mxu0
        %632 = vst [vmem:[%s328] sm:$0xff] %v626
        %633 = vst [vmem:[%s328 + $0x8] sm:$0xff] %v629
        %s634 = smul.u32 2, %s22
        %p635 = scmp.lt.s32.totalorder %s634, 3
        %s636 = scalar_select %p635, %s634, 3
        %s637 = smul.addr %s636, 8
        %s638 = scalar_lea.vmem %s7, %s637
        // Predicated region
        $region61: #{_lambda_.1} parent=47 // pred_check
          %p639 = pneg %p192
        $region62: #{_lambda_.1} parent=47 // pred_check_branch
          %641 = sbr.rel (%p639) target = $region64
        $region63: #{_lambda_.1} parent=47 // pred_region
          %s642 = smul.u32 2, %s22
        $region64: #{_lambda_.1} parent=47 // pred_fallthru
          _
      $region48: #{_lambda_.1} parent=5 // pred_fallthru
        _
      %p643 = scmp.le.s32.totalorder 2, %s17
      // Predicated region
      $region65: #{_lambda_.1} parent=5 // pred_check
        %p644 = pneg %p643
      $region66: #{_lambda_.1} parent=5 // pred_check_branch
        %646 = sbr.rel (%p644) target = $region68
      $region67: #{_lambda_.1} parent=5 // pred_region
        %s647 = ssub.s32 %s17, 2
        // Predicated region
        $region69: #{_lambda_.1} parent=67 // pred_check
          %p648 = pneg %p198
        $region70: #{_lambda_.1} parent=67 // pred_check_branch
          %650 = sbr.rel (%p648) target = $region72
        $region71: #{_lambda_.1} parent=67 // pred_region
          %s651 = smul.u32 2, %s23
          %p652 = scmp.lt.s32.totalorder %s651, 3
          %s653 = scalar_select %p652, %s651, 3
          %s654 = smul.addr %s653, 8
          %s655 = scalar_lea.vmem %s7, %s654
        $region72: #{_lambda_.1} parent=67 // pred_fallthru
          _
      $region68: #{_lambda_.1} parent=5 // pred_fallthru
        _
    $region6: #{_lambda_.1} parent=1 // loop_footer
      %s21 = sadd.s32 1, %s17
    $region7: #{_lambda_.1} parent=1 // loop_footer_branch
      %16 = sbr.rel target = $region3
    $region8: #{_lambda_.1} parent=1 // loop_exit
      _
    %656 = vsyncpa [#allocation3], 1
    %s657 = scalar_lea.sflag [#allocation3], 1
    %658 = vsyncpa %s657, 1
    %659 = vsyncpa [#allocation5], 1

</llo_original>
